<compile_context>
chip_gen: v7x
topology: tpu7x:2x2x1
jax: 0.10.0
libtpu: 0.0.40
codegen_flags: <defaults>
</compile_context>

<pallas_src>
import functools

import jax
import jax.numpy as jnp
from jax.experimental import pallas as pl
from jax.experimental.pallas import tpu as pltpu


# ----------------------------------------------------------------------------
# Generation-aware VMEM sizing
# ----------------------------------------------------------------------------
def _tpu_generation_params():
    """Returns (vmem_limit_bytes, tile_budget_bytes, min_tiles)."""
    try:
        vmem_cap = int(pltpu.get_tpu_info().vmem_capacity_bytes)
    except Exception:
        vmem_cap = 128 * 1024 * 1024  # conservative fallback: v5e/v6e class
    if vmem_cap <= 64 * 1024 * 1024:
        # v7x-class: 64 MiB physical VMEM per TC, 2 TensorCores per chip.
        vmem_limit = 48 * 1024 * 1024
        min_tiles = 2
    else:
        # v5e / v6e: 128 MiB physical VMEM, single TensorCore.
        vmem_limit = 64 * 1024 * 1024
        min_tiles = 1
    # Headroom for per-chunk f32 temporaries, labels, outputs, compiler scratch.
    tile_budget = (vmem_limit * 3) // 4
    return vmem_limit, tile_budget, min_tiles


def _choose_batch_tile(B, Sq, Sd, D, itemsize, budget_bytes, min_tiles=1):
    # Per batch row resident in VMEM: 2 double-buffered copies of each
    # embedding tile + the (TB, D) f32 sum/count accumulators.
    bytes_per_row = 2 * (Sq + Sd) * D * itemsize + 4 * D * 4
    tb = int(budget_bytes // max(bytes_per_row, 1))
    if min_tiles > 1 and B >= 8 * min_tiles:
        # Keep both v7x TensorCores busy: at least `min_tiles` grid steps.
        tb = min(tb, (pl.cdiv(B, min_tiles) // 8) * 8)
    if tb >= B:
        return B  # single tile covers the whole batch
    # (tb, 1) label blocks need tb % 8 == 0 (or tb == B) for the (8,128) rule;
    # floor at 8 -- see TODO above for the extreme long-sequence case.
    tb = max(8, (tb // 8) * 8)
    return min(tb, B)


def _validate_batch_tile(batch_tile, B):
    tb = int(batch_tile)
    if tb >= B:
        return B
    if tb % 8 != 0:
        tb = max(8, (tb // 8) * 8)  # round to a lowerable, sublane-aligned tile
    return min(tb, B)


def _seq_chunk(tb, S, D, max_chunk_bytes=2 * 1024 * 1024):
    """Sequence positions processed per inner-loop step: bounds the transient
    f32 upcast to ~max_chunk_bytes regardless of the batch tile size."""
    per_pos = max(tb * D * 4, 1)  # f32 bytes per sequence position in a chunk
    cs = max(1, max_chunk_bytes // per_pos)
    if cs >= S:
        return S
    if cs >= 8:
        cs = (cs // 8) * 8  # keep chunk starts sublane-aligned
    return max(1, min(S, cs))


# ----------------------------------------------------------------------------
# Kernel
# ----------------------------------------------------------------------------
def _masked_mean_over_seq(ref, S, D, chunk):
    """mean_without_zeros along the sequence axis, chunked so only (TB, D) f32
    accumulators are live (no full-tile f32 upcast / mask temporaries)."""
    tb = ref.shape[0]

    def chunk_stats(x):
        # x: (TB, cs, D) in the native input dtype.
        nz = (x != 0)                                    # compare in native dtype
        s = jnp.sum(x.astype(jnp.float32), axis=1)       # (TB, D)
        c = jnp.sum(nz.astype(jnp.float32), axis=1)      # (TB, D)
        return s, c

    n_full = S // chunk
    rem = S - n_full * chunk

    s_acc = jnp.zeros((tb, D), jnp.float32)
    c_acc = jnp.zeros((tb, D), jnp.float32)

    if n_full > 0:
        def body(i, carry):
            sa, ca = carry
            start = pl.multiple_of(i * chunk, chunk)
            s, c = chunk_stats(ref[:, pl.ds(start, chunk), :])
            return sa + s, ca + c

        s_acc, c_acc = jax.lax.fori_loop(
            0, n_full, body, (s_acc, c_acc), unroll=(n_full <= 8))

    if rem > 0:
        s, c = chunk_stats(ref[:, pl.ds(n_full * chunk, rem), :])
        s_acc, c_acc = s_acc + s, c_acc + c

    return s_acc / c_acc  # (TB, D); 0/0 -> NaN, matching the PyTorch reference


def _cosine_loss_kernel(q_ref, d_ref, lab_ref, out_ref, *,
                        total_rows, q_chunk, d_chunk):
    i = pl.program_id(0)
    tb = q_ref.shape[0]
    Sq, D = q_ref.shape[1], q_ref.shape[2]
    Sd = d_ref.shape[1]

    # mean_without_zeros along dim=1 (chunked, only (TB, D) f32 accumulators)
    q_mean = _masked_mean_over_seq(q_ref, Sq, D, q_chunk)   # (TB, D)
    d_mean = _masked_mean_over_seq(d_ref, Sd, D, d_chunk)   # (TB, D)

    # cosine similarity along the last dim (PyTorch eps = 1e-8), kept (TB, 1)
    dot = jnp.sum(q_mean * d_mean, axis=-1, keepdims=True)               # (TB, 1)
    q_norm = jnp.sqrt(jnp.sum(q_mean * q_mean, axis=-1, keepdims=True))  # (TB, 1)
    d_norm = jnp.sqrt(jnp.sum(d_mean * d_mean, axis=-1, keepdims=True))  # (TB, 1)
    cos = dot / jnp.maximum(q_norm * d_norm, 1e-8)                       # (TB, 1)

    # squared error per row; mask rows past the true batch size (padded tile)
    labels = lab_ref[...].astype(jnp.float32)                            # (TB, 1)
    diff = cos - labels
    sq_err = diff * diff
    row_ids = i * tb + jax.lax.broadcasted_iota(jnp.int32, (tb, 1), 0)
    valid = row_ids < total_rows
    partial = jnp.sum(jnp.where(valid, sq_err, 0.0))

    # per-tile partial sum, broadcast into a lane/sublane-aligned (1,8,128) block
    out_ref[...] = jnp.zeros(out_ref.shape, out_ref.dtype) + partial


# ----------------------------------------------------------------------------
# Wrapper
# ----------------------------------------------------------------------------
def cosine_similarity_loss(query_embeddings, doc_embeddings, labels,
                           batch_tile=None, seq_chunk=None):
    """query_embeddings: (B, Sq, D); doc_embeddings: (B, Sd, D); labels: (B,)."""
    B, Sq, D = query_embeddings.shape
    _, Sd, _ = doc_embeddings.shape

    labels_col = labels.astype(jnp.float32).reshape(B, 1)  # (B, 1)

    itemsize = max(jnp.dtype(query_embeddings.dtype).itemsize,
                   jnp.dtype(doc_embeddings.dtype).itemsize)

    vmem_limit, tile_budget, min_tiles = _tpu_generation_params()

    if batch_tile is None:
        tb = _choose_batch_tile(B, Sq, Sd, D, itemsize, tile_budget, min_tiles)
    else:
        tb = _validate_batch_tile(batch_tile, B)
    num_tiles = pl.cdiv(B, tb)

    if seq_chunk is None:
        q_chunk = _seq_chunk(tb, Sq, D)
        d_chunk = _seq_chunk(tb, Sd, D)
    else:
        q_chunk = min(int(seq_chunk), Sq)
        d_chunk = min(int(seq_chunk), Sd)

    kernel = functools.partial(_cosine_loss_kernel, total_rows=B,
                               q_chunk=q_chunk, d_chunk=d_chunk)

    # Dtype-aware, mem-bound cost hint: ~5 VPU ops per loaded element in the
    # mean/count pass plus the row-wise dot/norm pass and the per-tile output.
    elems = B * (Sq + Sd) * D
    cost = pl.CostEstimate(
        flops=5 * elems + 7 * B * D + 10 * B,
        transcendentals=2 * B,
        bytes_accessed=elems * itemsize + B * 4 + num_tiles * 8 * 128 * 4,
    )

    partials = pl.pallas_call(
        kernel,
        out_shape=jax.ShapeDtypeStruct((num_tiles, 8, 128), jnp.float32),
        grid_spec=pltpu.PrefetchScalarGridSpec(
            num_scalar_prefetch=0,
            grid=(num_tiles,),
            in_specs=[
                pl.BlockSpec((tb, Sq, D), lambda i: (i, 0, 0)),
                pl.BlockSpec((tb, Sd, D), lambda i: (i, 0, 0)),
                pl.BlockSpec((tb, 1), lambda i: (i, 0)),
            ],
            out_specs=pl.BlockSpec((1, 8, 128), lambda i: (i, 0, 0)),
        ),
        compiler_params=pltpu.CompilerParams(
            dimension_semantics=("parallel",),
            vmem_limit_bytes=vmem_limit,
        ),
        cost_estimate=cost,
    )(query_embeddings, doc_embeddings, labels_col)

    # tiny final reduction outside the kernel: sum of per-tile partials / B
    return jnp.sum(partials[:, 0, 0]) / B


# ----------------------------------------------------------------------------
# Pure-JAX reference + tests
# ----------------------------------------------------------------------------
def _reference(q, d, lab):
    qm = q.sum(1) / (q != 0).sum(1)
    dm = d.sum(1) / (d != 0).sum(1)
    cos = jnp.sum(qm * dm, -1) / jnp.maximum(
        jnp.linalg.norm(qm, axis=-1) * jnp.linalg.norm(dm, axis=-1), 1e-8)
    return jnp.mean((cos - lab) ** 2)


if __name__ == "__main__":
    key = jax.random.PRNGKey(0)
    kq, kd, kl, kq2, kd2, kl2, kq3, kd3, kl3 = jax.random.split(key, 9)

    # --- test 1: small module-consistent shapes, single batch tile ---
    B, Sq, Sd, D = 2, 8, 8, 32
    q1 = jax.random.normal(kq, (B, Sq, D), dtype=jnp.float32)
    d1 = jax.random.normal(kd, (B, Sd, D), dtype=jnp.float32)
    l1 = jax.random.uniform(kl, (B,), dtype=jnp.float32)

    loss1 = cosine_similarity_loss(q1, d1, l1)
    jax.block_until_ready(loss1)
    ref1 = _reference(q1, d1, l1)
    assert jnp.allclose(loss1, ref1, rtol=1e-5, atol=1e-6), (loss1, ref1)

    # --- test 2: forced batch tiling (grid of 3, last tile masked) ---
    B2, Sq2, Sd2, D2 = 20, 4, 6, 32
    q2 = jax.random.normal(kq2, (B2, Sq2, D2), dtype=jnp.float32)
    d2 = jax.random.normal(kd2, (B2, Sd2, D2), dtype=jnp.float32)
    l2 = jax.random.uniform(kl2, (B2,), dtype=jnp.float32)

    loss2 = cosine_similarity_loss(q2, d2, l2, batch_tile=8)
    jax.block_until_ready(loss2)
    ref2 = _reference(q2, d2, l2)
    assert jnp.allclose(loss2, ref2, rtol=1e-5, atol=1e-6), (loss2, ref2)

    # --- test 3: bf16 inputs + forced sequence chunking (loop + remainder) ---
    B3, Sq3, Sd3, D3 = 4, 10, 7, 32
    q3 = jax.random.normal(kq3, (B3, Sq3, D3), dtype=jnp.float32).astype(jnp.bfloat16)
    d3 = jax.random.normal(kd3, (B3, Sd3, D3), dtype=jnp.float32).astype(jnp.bfloat16)
    l3 = jax.random.uniform(kl3, (B3,), dtype=jnp.float32)

    loss3 = cosine_similarity_loss(q3, d3, l3, seq_chunk=4)
    jax.block_until_ready(loss3)
    ref3 = _reference(q3.astype(jnp.float32), d3.astype(jnp.float32), l3)
    assert jnp.allclose(loss3, ref3, rtol=1e-4, atol=1e-5), (loss3, ref3)

    print("KERNEL_OK")
</pallas_src>

<mosaic_0001>
module attributes {stable_mosaic.version = 11 : i64} {
  func.func @_cosine_loss_kernel(%arg0: i32, %arg1: memref<2x8x32xf32, #tpu.memory_space<vmem>>, %arg2: memref<2x8x32xf32, #tpu.memory_space<vmem>>, %arg3: memref<2x1xf32, #tpu.memory_space<vmem>>, %arg4: memref<1x8x128xf32, #tpu.memory_space<vmem>>) attributes {dimension_semantics = [#tpu.dimension_semantics<parallel>], iteration_bounds = array<i64: 1>, scalar_prefetch = 0 : i64, scratch_operands = 0 : i64, tpu.core_type = #tpu.core_type<tc>, window_params = [{transform_indices = @transform_0, window_bounds = array<i64: 2, 8, 32>}, {transform_indices = @transform_1, window_bounds = array<i64: 2, 8, 32>}, {transform_indices = @transform_2, window_bounds = array<i64: 2, 1>}, {transform_indices = @transform_3, window_bounds = array<i64: 1, 8, 128>}]} {
    %cst = arith.constant 0.000000e+00 : f32
    %0 = vector.broadcast %cst : f32 to vector<2x32xf32>
    %cst_0 = arith.constant 0.000000e+00 : f32
    %1 = vector.broadcast %cst_0 : f32 to vector<2x32xf32>
    %c0_i32 = arith.constant 0 : i32
    %c8_i32 = arith.constant 8 : i32
    %2 = arith.muli %c0_i32, %c8_i32 : i32
    %3 = tpu.assume_multiple %2, 8 : i32
    %c0 = arith.constant 0 : index
    %4 = arith.index_cast %3 : i32 to index
    %c0_1 = arith.constant 0 : index
    %5 = vector.load %arg1[%c0, %4, %c0_1] : memref<2x8x32xf32, #tpu.memory_space<vmem>>, vector<2x8x32xf32>
    %cst_2 = arith.constant 0.000000e+00 : f32
    %6 = vector.broadcast %cst_2 : f32 to vector<2x8x32xf32>
    %7 = arith.cmpf one, %5, %6 : vector<2x8x32xf32>
    %cst_3 = arith.constant dense<0.000000e+00> : vector<2x32xf32>
    %8 = vector.multi_reduction <add>, %5, %cst_3 [1] : vector<2x8x32xf32> to vector<2x32xf32>
    %9 = arith.extui %7 : vector<2x8x32xi1> to vector<2x8x32xi32>
    %10 = arith.sitofp %9 : vector<2x8x32xi32> to vector<2x8x32xf32>
    %cst_4 = arith.constant dense<0.000000e+00> : vector<2x32xf32>
    %11 = vector.multi_reduction <add>, %10, %cst_4 [1] : vector<2x8x32xf32> to vector<2x32xf32>
    %12 = arith.addf %0, %8 : vector<2x32xf32>
    %13 = arith.addf %1, %11 : vector<2x32xf32>
    %c1_i32 = arith.constant 1 : i32
    %14 = arith.divf %12, %13 : vector<2x32xf32>
    %cst_5 = arith.constant 0.000000e+00 : f32
    %15 = vector.broadcast %cst_5 : f32 to vector<2x32xf32>
    %cst_6 = arith.constant 0.000000e+00 : f32
    %16 = vector.broadcast %cst_6 : f32 to vector<2x32xf32>
    %c0_i32_7 = arith.constant 0 : i32
    %c8_i32_8 = arith.constant 8 : i32
    %17 = arith.muli %c0_i32_7, %c8_i32_8 : i32
    %18 = tpu.assume_multiple %17, 8 : i32
    %c0_9 = arith.constant 0 : index
    %19 = arith.index_cast %18 : i32 to index
    %c0_10 = arith.constant 0 : index
    %20 = vector.load %arg2[%c0_9, %19, %c0_10] : memref<2x8x32xf32, #tpu.memory_space<vmem>>, vector<2x8x32xf32>
    %cst_11 = arith.constant 0.000000e+00 : f32
    %21 = vector.broadcast %cst_11 : f32 to vector<2x8x32xf32>
    %22 = arith.cmpf one, %20, %21 : vector<2x8x32xf32>
    %cst_12 = arith.constant dense<0.000000e+00> : vector<2x32xf32>
    %23 = vector.multi_reduction <add>, %20, %cst_12 [1] : vector<2x8x32xf32> to vector<2x32xf32>
    %24 = arith.extui %22 : vector<2x8x32xi1> to vector<2x8x32xi32>
    %25 = arith.sitofp %24 : vector<2x8x32xi32> to vector<2x8x32xf32>
    %cst_13 = arith.constant dense<0.000000e+00> : vector<2x32xf32>
    %26 = vector.multi_reduction <add>, %25, %cst_13 [1] : vector<2x8x32xf32> to vector<2x32xf32>
    %27 = arith.addf %15, %23 : vector<2x32xf32>
    %28 = arith.addf %16, %26 : vector<2x32xf32>
    %c1_i32_14 = arith.constant 1 : i32
    %29 = arith.divf %27, %28 : vector<2x32xf32>
    %30 = arith.mulf %14, %29 : vector<2x32xf32>
    %cst_15 = arith.constant dense<0.000000e+00> : vector<2xf32>
    %31 = vector.multi_reduction <add>, %30, %cst_15 [1] : vector<2x32xf32> to vector<2xf32>
    %32 = vector.shape_cast %31 : vector<2xf32> to vector<2x1xf32>
    %33 = arith.mulf %14, %14 : vector<2x32xf32>
    %cst_16 = arith.constant dense<0.000000e+00> : vector<2xf32>
    %34 = vector.multi_reduction <add>, %33, %cst_16 [1] : vector<2x32xf32> to vector<2xf32>
    %35 = vector.shape_cast %34 : vector<2xf32> to vector<2x1xf32>
    %36 = math.sqrt %35 : vector<2x1xf32>
    %37 = arith.mulf %29, %29 : vector<2x32xf32>
    %cst_17 = arith.constant dense<0.000000e+00> : vector<2xf32>
    %38 = vector.multi_reduction <add>, %37, %cst_17 [1] : vector<2x32xf32> to vector<2xf32>
    %39 = vector.shape_cast %38 : vector<2xf32> to vector<2x1xf32>
    %40 = math.sqrt %39 : vector<2x1xf32>
    %41 = arith.mulf %36, %40 : vector<2x1xf32>
    %cst_18 = arith.constant 9.99999993E-9 : f32
    %42 = vector.broadcast %cst_18 : f32 to vector<2x1xf32>
    %43 = arith.maximumf %41, %42 : vector<2x1xf32>
    %44 = arith.divf %32, %43 : vector<2x1xf32>
    %c0_19 = arith.constant 0 : index
    %c0_20 = arith.constant 0 : index
    %45 = vector.load %arg3[%c0_19, %c0_20] : memref<2x1xf32, #tpu.memory_space<vmem>>, vector<2x1xf32>
    %46 = arith.subf %44, %45 : vector<2x1xf32>
    %47 = arith.mulf %46, %46 : vector<2x1xf32>
    %c2_i32 = arith.constant 2 : i32
    %48 = arith.muli %arg0, %c2_i32 : i32
    %49 = tpu.iota {dimensions = array<i32: 0>} : vector<2x1xi32>
    %50 = vector.broadcast %48 : i32 to vector<2x1xi32>
    %51 = arith.addi %50, %49 : vector<2x1xi32>
    %c2_i32_21 = arith.constant 2 : i32
    %52 = vector.broadcast %c2_i32_21 : i32 to vector<2x1xi32>
    %53 = arith.cmpi slt, %51, %52 : vector<2x1xi32>
    %cst_22 = arith.constant 0.000000e+00 : f32
    %54 = vector.broadcast %cst_22 : f32 to vector<2x1xf32>
    %55 = arith.select %53, %47, %54 : vector<2x1xi1>, vector<2x1xf32>
    %56 = vector.shape_cast %55 : vector<2x1xf32> to vector<1x2x1xf32>
    %cst_23 = arith.constant dense<0.000000e+00> : vector<1xf32>
    %57 = vector.multi_reduction <add>, %56, %cst_23 [1, 2] : vector<1x2x1xf32> to vector<1xf32>
    %58 = vector.shape_cast %57 : vector<1xf32> to vector<1x1x1xf32>
    %59 = vector.extract %58[0, 0, 0] : f32 from vector<1x1x1xf32>
    %cst_24 = arith.constant 0.000000e+00 : f32
    %60 = vector.broadcast %cst_24 : f32 to vector<1x8x128xf32>
    %61 = vector.broadcast %59 : f32 to vector<1x8x128xf32>
    %62 = arith.addf %60, %61 : vector<1x8x128xf32>
    %c0_25 = arith.constant 0 : index
    %c0_26 = arith.constant 0 : index
    %c0_27 = arith.constant 0 : index
    %63 = vector.load %arg4[%c0_25, %c0_26, %c0_27] : memref<1x8x128xf32, #tpu.memory_space<vmem>>, vector<1x8x128xf32>
    tpu.vector_store %arg4[%c0_25, %c0_26, %c0_27], %62 {strides = array<i32>} : memref<1x8x128xf32, #tpu.memory_space<vmem>>, vector<1x8x128xf32>,
    return
  }
  func.func @transform_0(%arg0: i32) -> (i32, i32, i32) {
    %c0_i32 = arith.constant 0 : i32
    %c0_i32_0 = arith.constant 0 : i32
    %c0_i32_1 = arith.constant 0 : i32
    return %arg0, %c0_i32, %c0_i32_0 : i32, i32, i32
  }
  func.func @transform_1(%arg0: i32) -> (i32, i32, i32) {
    %c0_i32 = arith.constant 0 : i32
    %c0_i32_0 = arith.constant 0 : i32
    %c0_i32_1 = arith.constant 0 : i32
    return %arg0, %c0_i32, %c0_i32_0 : i32, i32, i32
  }
  func.func @transform_2(%arg0: i32) -> (i32, i32) {
    %c0_i32 = arith.constant 0 : i32
    %c0_i32_0 = arith.constant 0 : i32
    return %arg0, %c0_i32 : i32, i32
  }
  func.func @transform_3(%arg0: i32) -> (i32, i32, i32) {
    %c0_i32 = arith.constant 0 : i32
    %c0_i32_0 = arith.constant 0 : i32
    %c0_i32_1 = arith.constant 0 : i32
    return %arg0, %c0_i32, %c0_i32_0 : i32, i32, i32
  }
}

</mosaic_0001>

<llo_original>
// kernel: tpu_custom_call.1
$region0: #{tpu_custom_call.1}
  #allocation0 [shape = 'u32[]', space=smem, size = 0x4, offset = 0x4, fixed_abs, tag = 'smem constant byte address 0x4 - core index']
  #allocation1 [shape = 'u32[144,128]{1,0:T(1,128)}', space=vmem, size = 0x12000, scoped, tag = 'internal scratch']
  %s0 = inlined_call_operand.hbm [shape: f32[2,8,32], index: 0, kind: input, shape index: {}]
  %s1 = inlined_call_operand.hbm [shape: f32[2,8,32], index: 1, kind: input, shape index: {}]
  %s2 = inlined_call_operand.hbm [shape: f32[2,1], index: 2, kind: input, shape index: {}]
  %s3 = inlined_call_operand.hbm [shape: f32[1,8,128], index: 3, kind: output, shape index: {}]
  %s4 = sld [smem:[#allocation0]]
  $region34: #{tpu_custom_call.1} parent=0
    _
  %s6 = ssub.s32 1, %s4
  %s7 = scalar_select 0, %s6, %s4
  $region1: #{tpu_custom_call.1} parent=0
    #allocation2 [shape = 'u8[8192]{0}', space=vmem, size = 0x2000, scoped, tag = 'input window, operand 0, single buffered']
    #allocation3 [shape = 's32[1]{0}', space=sflag, size = 0x4, scoped, tag = 'scoped memory for tpu_custom_call.1']
    #allocation4 [shape = 's32[1]{0}', space=sflag, size = 0x4, scoped, tag = 'scoped memory for tpu_custom_call.1']
    #allocation5 [shape = 'u8[8192]{0}', space=vmem, size = 0x2000, scoped, tag = 'input window, operand 1, single buffered']
    #allocation6 [shape = 's32[1]{0}', space=sflag, size = 0x4, scoped, tag = 'scoped memory for tpu_custom_call.1']
    #allocation7 [shape = 'u8[1024]{0}', space=vmem, size = 0x400, scoped, tag = 'input window, operand 2, single buffered']
    #allocation8 [shape = 'u8[4096]{0}', space=vmem, size = 0x1000, scoped, tag = 'output window, operand 0, single buffered']
    %8 = vsyncpa [#allocation3], 0
    %9 = vsyncpa [#allocation6], 0
    %10 = vsyncpa [#allocation4], 0
    // Predicated region
    $region2: #{tpu_custom_call.1} parent=1 // pred_check
      _
    $region3: #{tpu_custom_call.1} parent=1 // pred_check_branch
      %12 = sbr.rel (0) target = $region5
    $region4: #{tpu_custom_call.1} parent=1 // pred_region
      %s14 = ssub.s32 256, 256
      %15 = vsyncadd [#allocation3], %s14
      %s16 = sshll.u32 [#allocation2], 4
      %s17 = int_to_ptr.vmem [resolvable:$true] %s16
      %22 = dma.hbm_to_vmem [thread:$0]  %s0, 256, %s17, [#allocation3], 128, 128, 8
    $region5: #{tpu_custom_call.1} parent=1 // pred_fallthru
      _
    // Predicated region
    $region6: #{tpu_custom_call.1} parent=1 // pred_check
      _
    $region7: #{tpu_custom_call.1} parent=1 // pred_check_branch
      %24 = sbr.rel (0) target = $region9
    $region8: #{tpu_custom_call.1} parent=1 // pred_region
      %s26 = ssub.s32 256, 256
      %27 = vsyncadd [#allocation6], %s26
      %s28 = sshll.u32 [#allocation5], 4
      %s29 = int_to_ptr.vmem [resolvable:$true] %s28
      %34 = dma.hbm_to_vmem [thread:$0]  %s1, 256, %s29, [#allocation6], 128, 128, 8
    $region9: #{tpu_custom_call.1} parent=1 // pred_fallthru
      _
    // Predicated region
    $region10: #{tpu_custom_call.1} parent=1 // pred_check
      _
    $region11: #{tpu_custom_call.1} parent=1 // pred_check_branch
      %36 = sbr.rel (0) target = $region13
    $region12: #{tpu_custom_call.1} parent=1 // pred_region
      %s38 = ssub.s32 32, 32
      %39 = vsyncadd [#allocation6], %s38
      %s41 = sshll.u32 [#allocation7], 4
      %s42 = int_to_ptr.vmem [resolvable:$true] %s41
      %44 = dma.hbm_to_vmem [thread:$0]  %s2, 32, %s42, [#allocation6]
    $region13: #{tpu_custom_call.1} parent=1 // pred_fallthru
      _
    // Predicated region
    $region14: #{tpu_custom_call.1} parent=1 // pred_check
      _
    $region15: #{tpu_custom_call.1} parent=1 // pred_check_branch
      %46 = sbr.rel (0) target = $region17
    $region16: #{tpu_custom_call.1} parent=1 // pred_region
      %47 = dma.done [#allocation3], 256
    $region17: #{tpu_custom_call.1} parent=1 // pred_fallthru
      _
    // Predicated region
    $region18: #{tpu_custom_call.1} parent=1 // pred_check
      _
    $region19: #{tpu_custom_call.1} parent=1 // pred_check_branch
      %49 = sbr.rel (0) target = $region21
    $region20: #{tpu_custom_call.1} parent=1 // pred_region
      %50 = dma.done [#allocation6], 256
    $region21: #{tpu_custom_call.1} parent=1 // pred_fallthru
      _
    // Predicated region
    $region22: #{tpu_custom_call.1} parent=1 // pred_check
      _
    $region23: #{tpu_custom_call.1} parent=1 // pred_check_branch
      %52 = sbr.rel (0) target = $region25
    $region24: #{tpu_custom_call.1} parent=1 // pred_region
      %53 = dma.done [#allocation6], 32
    $region25: #{tpu_custom_call.1} parent=1 // pred_fallthru
      _
    %v54 = vld [vmem:[#allocation2] sm:$0xff]
    %v55 = vld [vmem:[#allocation2 + $0x8] sm:$0xff]
    %vm56 = vcmp.ne.f32.partialorder %v54, 0.0
    %vm57 = vcmp.ne.f32.partialorder %v55, 0.0
    %vm58 = vcmask 261120
    %v59 = vsel %vm58, %v54, 0.0
    %v60 = vrot.slane %v59, 4
    %v61 = vadd.f32 %v59, %v60
    %v62 = vrot.slane %v61, 2
    %v63 = vadd.f32 %v61, %v62
    %v64 = vrot.slane %v63, 1
    %v65 = vadd.f32 %v63, %v64
    %v66 = vsel %vm58, %v55, 0.0
    %v67 = vrot.slane %v66, 4
    %v68 = vadd.f32 %v66, %v67
    %v69 = vrot.slane %v68, 2
    %v70 = vadd.f32 %v68, %v69
    %v71 = vrot.slane %v70, 1
    %v72 = vadd.f32 %v70, %v71
    %v73 = vsel %vm56, 1, 0
    %v74 = vsel %vm57, 1, 0
    %v75 = vcvt.s32.f32 %v73
    %v76 = vcvt.s32.f32 %v74
    %v77 = vsel %vm58, %v75, 0.0
    %v78 = vrot.slane %v77, 4
    %v79 = vadd.f32 %v77, %v78
    %v80 = vrot.slane %v79, 2
    %v81 = vadd.f32 %v79, %v80
    %v82 = vrot.slane %v81, 1
    %v83 = vadd.f32 %v81, %v82
    %v84 = vsel %vm58, %v76, 0.0
    %v85 = vrot.slane %v84, 4
    %v86 = vadd.f32 %v84, %v85
    %v87 = vrot.slane %v86, 2
    %v88 = vadd.f32 %v86, %v87
    %v89 = vrot.slane %v88, 1
    %v90 = vadd.f32 %v88, %v89
    %v91 = vadd.f32 %v65, 0.0
    %v92 = vadd.f32 %v72, 0.0
    %v93 = vadd.f32 %v83, 0.0
    %v94 = vadd.f32 %v90, 0.0
    %v95 = vrcp.pop %v93
    %v96 = vmul.f32 %v91, %v95
    %v97 = vrcp.pop %v94
    %v98 = vmul.f32 %v92, %v97
    %v99 = vld [vmem:[#allocation5] sm:$0xff]
    %v100 = vld [vmem:[#allocation5 + $0x8] sm:$0xff]
    %vm101 = vcmp.ne.f32.partialorder %v99, 0.0
    %vm102 = vcmp.ne.f32.partialorder %v100, 0.0
    %v103 = vsel %vm58, %v99, 0.0
    %v104 = vrot.slane %v103, 4
    %v105 = vadd.f32 %v103, %v104
    %v106 = vrot.slane %v105, 2
    %v107 = vadd.f32 %v105, %v106
    %v108 = vrot.slane %v107, 1
    %v109 = vadd.f32 %v107, %v108
    %v110 = vsel %vm58, %v100, 0.0
    %v111 = vrot.slane %v110, 4
    %v112 = vadd.f32 %v110, %v111
    %v113 = vrot.slane %v112, 2
    %v114 = vadd.f32 %v112, %v113
    %v115 = vrot.slane %v114, 1
    %v116 = vadd.f32 %v114, %v115
    %v117 = vsel %vm101, 1, 0
    %v118 = vsel %vm102, 1, 0
    %v119 = vcvt.s32.f32 %v117
    %v120 = vcvt.s32.f32 %v118
    %v121 = vsel %vm58, %v119, 0.0
    %v122 = vrot.slane %v121, 4
    %v123 = vadd.f32 %v121, %v122
    %v124 = vrot.slane %v123, 2
    %v125 = vadd.f32 %v123, %v124
    %v126 = vrot.slane %v125, 1
    %v127 = vadd.f32 %v125, %v126
    %v128 = vsel %vm58, %v120, 0.0
    %v129 = vrot.slane %v128, 4
    %v130 = vadd.f32 %v128, %v129
    %v131 = vrot.slane %v130, 2
    %v132 = vadd.f32 %v130, %v131
    %v133 = vrot.slane %v132, 1
    %v134 = vadd.f32 %v132, %v133
    %v135 = vadd.f32 %v109, 0.0
    %v136 = vadd.f32 %v116, 0.0
    %v137 = vadd.f32 %v127, 0.0
    %v138 = vadd.f32 %v134, 0.0
    %v139 = vrcp.pop %v137
    %v140 = vmul.f32 %v135, %v139
    %v141 = vrcp.pop %v138
    %v142 = vmul.f32 %v136, %v141
    %v143 = vmul.f32 %v96, %v140
    %v144 = vmul.f32 %v98, %v142
    %vm147 = vcmask 1041409
    %v148 = vsel %vm147, %v144, %v143
    %vm150 = vcmask 254976
    %v151 = vsel %vm150, %v148, 0.0
    %152 = vadd.xlane.f32.xlu0 %v151
    %v153 = vpop.xlane.xlu0 %152
    %v154 = vmul.f32 %v96, %v96
    %v155 = vmul.f32 %v98, %v98
    %v158 = vsel %vm147, %v155, %v154
    %v160 = vsel %vm150, %v158, 0.0
    %161 = vadd.xlane.f32.xlu0 %v160
    %v162 = vpop.xlane.xlu0 %161
    %v163 = vrsqrt.pop %v162
    %v164 = vmul.f32 %v162, %v163
    %vm165 = vcmp.eq.f32.partialorder %v162, inf
    %v166 = vsel %vm165, %v162, %v164
    %vm167 = vcmp.eq.f32.partialorder %v162, 0.0
    %v168 = vand.u32 %v162, 2147483648
    %v169 = vsel %vm167, %v168, %v166
    %v170 = vmul.f32 %v140, %v140
    %v171 = vmul.f32 %v142, %v142
    %v174 = vsel %vm147, %v171, %v170
    %v176 = vsel %vm150, %v174, 0.0
    %177 = vadd.xlane.f32.xlu0 %v176
    %v178 = vpop.xlane.xlu0 %177
    %v179 = vrsqrt.pop %v178
    %v180 = vmul.f32 %v178, %v179
    %vm181 = vcmp.eq.f32.partialorder %v178, inf
    %v182 = vsel %vm181, %v178, %v180
    %vm183 = vcmp.eq.f32.partialorder %v178, 0.0
    %v184 = vand.u32 %v178, 2147483648
    %v185 = vsel %vm183, %v184, %v182
    %v186 = vmul.f32 %v169, %v185
    %v187 = vmax.f32 %v186, 1e-08
    %v188 = vrcp.pop %v187
    %v189 = vmul.f32 %v153, %v188
    %v190 = vld [vmem:[#allocation7] sm:$0x3]
    %v191 = vsub.f32 %v189, %v190
    %v192 = vmul.f32 %v191, %v191
    %s193 = smul.u32 0, 2
    %v194 = vlaneseq
    %v195 = vshrl.u32 %v194, 7
    %v196 = vstv %s193
    %v197 = vadd.s32 %v196, %v195
    %vm198 = vcmp.lt.s32.totalorder %v197, 2
    %v199 = vsel %vm198, %v192, 0.0
    %vm200 = vcmask 1024
    %v201 = vsel %vm200, %v199, 0.0
    %202 = vadd.xlane.f32.xlu0 %v201
    %v203 = vpop.xlane.xlu0 %202
    %v204 = vrot.slane %v203, 4
    %v205 = vadd.f32 %v203, %v204
    %v206 = vrot.slane %v205, 2
    %v207 = vadd.f32 %v205, %v206
    %v208 = vrot.slane %v207, 1
    %v209 = vadd.f32 %v207, %v208
    %s210 = vtos %v209
    %v211 = vstv %s210
    %v212 = vadd.f32 %v211, 0.0
    %213 = vst [vmem:[#allocation8] sm:$0xff] %v212
    // Predicated region
    $region26: #{tpu_custom_call.1} parent=1 // pred_check
      _
    $region27: #{tpu_custom_call.1} parent=1 // pred_check_branch
      %215 = sbr.rel (0) target = $region29
    $region28: #{tpu_custom_call.1} parent=1 // pred_region
      %s217 = ssub.s32 128, 128
      %218 = vsyncadd [#allocation4], %s217
      %s220 = sshll.u32 [#allocation8], 4
      %s221 = int_to_ptr.vmem [resolvable:$true] %s220
      %223 = dma.vmem_to_hbm [thread:$0]  %s221, 128, %s3, [#allocation4]
    $region29: #{tpu_custom_call.1} parent=1 // pred_fallthru
      _
    // Predicated region
    $region30: #{tpu_custom_call.1} parent=1 // pred_check
      _
    $region31: #{tpu_custom_call.1} parent=1 // pred_check_branch
      %225 = sbr.rel (0) target = $region33
    $region32: #{tpu_custom_call.1} parent=1 // pred_region
      %226 = dma.done [#allocation4], 128
    $region33: #{tpu_custom_call.1} parent=1 // pred_fallthru
      _
    %227 = vsyncpa [#allocation3], 1
    %228 = vsyncpa [#allocation6], 1
    %229 = vsyncpa [#allocation4], 1

</llo_original>
